<compile_context>
chip_gen: v7x
topology: tpu7x:2x2x1
jax: 0.10.0
libtpu: 0.0.40
codegen_flags: <defaults>
</compile_context>

<pallas_src>
import functools

import jax
import jax.numpy as jnp
from jax.experimental import pallas as pl
from jax.experimental.pallas import tpu as pltpu


def _maxpool_kernel(x_ref, o_ref, *, width: int, ph: int, pw: int):
    """One grid step of ph x pw (stride == kernel) max pooling.

    x_ref: (tile_rows, ph*width) — each row = ph consecutive image rows concatenated.
    o_ref: (tile_rows, width//pw) — pooled output rows.
    """
    wo = width // pw

    # Vertical (H-direction) window max: contiguous lane slices of the ref.
    vmax = x_ref[:, :width]
    for r in range(1, ph):
        vmax = jnp.maximum(vmax, x_ref[:, r * width:(r + 1) * width])

    if pw == 1:
        o_ref[...] = vmax.astype(o_ref.dtype)
        return

    # Horizontal (W-direction) window max + stride-pw downsample, done as pw
    # 0/1 selection matmuls (exact; MXU is idle in this mem-bound kernel), which
    # avoids strided lane access / minor-dim reshapes.
    row_i = jax.lax.broadcasted_iota(jnp.int32, (width, wo), 0)
    col_i = jax.lax.broadcasted_iota(jnp.int32, (width, wo), 1)

    acc = None
    for j in range(pw):
        sel = (row_i == pw * col_i + j).astype(vmax.dtype)   # picks cols j, pw+j, ...
        part = jnp.dot(vmax, sel, preferred_element_type=jnp.float32)
        acc = part if acc is None else jnp.maximum(acc, part)

    o_ref[...] = acc.astype(o_ref.dtype)


def maxpool_nonoverlap(x: jax.Array, ph: int, pw: int,
                       *, vmem_budget_bytes: int = 8 * 1024 * 1024) -> jax.Array:
    """ph x pw / stride (ph, pw) max pooling of an NCHW tensor via a Pallas TPU kernel."""
    B, C, H, W = x.shape
    assert H % ph == 0 and W % pw == 0, "non-overlapping pooling requires divisible dims"
    # TODO(synk): integer dtypes would need a non-MXU compaction path; only floats here.
    assert jnp.issubdtype(x.dtype, jnp.floating), "maxpool kernel supports float dtypes"

    if ph == 1 and pw == 1:
        return x

    Ho, Wo = H // ph, W // pw
    rows = B * C * Ho

    # Free (memory-order-preserving) view: each row = ph consecutive image rows.
    x2 = x.reshape(rows, ph * W)

    # Row tile sized to a VMEM budget (input + output blocks, double buffered),
    # multiple of 8 sublanes; whole problem in one step when it fits.
    itemsize = x.dtype.itemsize
    bytes_per_row = (ph * W + Wo) * itemsize * 2  # x2 block + out block, double-buffered
    tr_cap = max(8, (vmem_budget_bytes // bytes_per_row) // 8 * 8)
    tr = rows if rows <= tr_cap else tr_cap
    grid = (pl.cdiv(rows, tr),)

    out2 = pl.pallas_call(
        functools.partial(_maxpool_kernel, width=W, ph=ph, pw=pw),
        out_shape=jax.ShapeDtypeStruct((rows, Wo), x.dtype),
        grid_spec=pltpu.PrefetchScalarGridSpec(
            num_scalar_prefetch=0,
            grid=grid,
            in_specs=[pl.BlockSpec((tr, ph * W), lambda i: (i, 0))],
            out_specs=pl.BlockSpec((tr, Wo), lambda i: (i, 0)),
        ),
        compiler_params=pltpu.CompilerParams(
            dimension_semantics=("parallel",),
        ),
    )(x2)

    return out2.reshape(B, C, Ho, Wo)


class MaxPool2dPallas:
    """Pallas equivalent of torch.nn.MaxPool2d with stride == kernel_size."""

    def __init__(self, kernel_size=2, stride=None):
        kh, kw = (kernel_size, kernel_size) if isinstance(kernel_size, int) else tuple(kernel_size)
        if stride is None:
            stride = (kh, kw)
        sh, sw = (stride, stride) if isinstance(stride, int) else tuple(stride)
        # TODO(synk): overlapping / padded / dilated pooling is not implemented; only the
        # canonical non-overlapping (stride == kernel_size) pooling used by SidecarMap.
        assert (sh, sw) == (kh, kw), "only stride == kernel_size pooling supported"
        self.kh, self.kw = kh, kw

    def __call__(self, x: jax.Array) -> jax.Array:
        return maxpool_nonoverlap(x, self.kh, self.kw)


class SidecarMapPallas:
    """JAX/Pallas equivalent of the PyTorch SidecarMap module.

    Takes a list of non-trainable layer callables (mainly maxpool layers) and applies
    them sequentially, exactly like nn.Sequential(*main_network_layer)(x). Consecutive
    non-overlapping maxpool layers are fused into a single pooling kernel (exactly
    equivalent since max over nested, non-overlapping windows composes), saving one
    HBM round trip per fused pair.
    """

    requires_training: bool = False

    def __init__(self, main_network_layer):
        self.layers = self._fuse_pools(list(main_network_layer))

    @staticmethod
    def _fuse_pools(layers):
        fused = []
        for layer in layers:
            if (fused
                    and isinstance(layer, MaxPool2dPallas)
                    and isinstance(fused[-1], MaxPool2dPallas)):
                prev = fused.pop()
                fused.append(MaxPool2dPallas(
                    kernel_size=(prev.kh * layer.kh, prev.kw * layer.kw)))
            else:
                fused.append(layer)
        return fused

    def __call__(self, x: jax.Array) -> jax.Array:
        for layer in self.layers:
            x = layer(x)
        return x


if __name__ == "__main__":
    key = jax.random.PRNGKey(0)

    B, C, H, W = 2, 4, 16, 16
    x = jax.random.normal(key, (B, C, H, W), dtype=jnp.float32)

    # Plain-JAX reference (same math, no Pallas).
    def ref_pool(t):
        b, c, h, w = t.shape
        return t.reshape(b, c, h // 2, 2, w // 2, 2).max(axis=(3, 5))

    # Single 2x2 maxpool layer (un-fused path).
    pool1 = jax.block_until_ready(MaxPool2dPallas(2, 2)(x))
    assert pool1.shape == (B, C, H // 2, W // 2), pool1.shape
    assert bool(jnp.allclose(pool1, ref_pool(x), atol=1e-6, rtol=1e-6)), "pool1 mismatch"

    # SidecarMap wrapping two non-trainable maxpool layers (fused into one 4x4 pool).
    sidecar = SidecarMapPallas([MaxPool2dPallas(2, 2), MaxPool2dPallas(2, 2)])
    out = jax.block_until_ready(sidecar(x))

    ref = ref_pool(ref_pool(x))
    assert out.shape == (B, C, H // 4, W // 4), out.shape
    assert bool(jnp.allclose(out, ref, atol=1e-6, rtol=1e-6)), "mismatch vs reference"

    print("KERNEL_OK")
</pallas_src>

<mosaic_0001>
module attributes {stable_mosaic.version = 11 : i64} {
  func.func @_maxpool_kernel(%arg0: i32, %arg1: memref<64x32xf32, #tpu.memory_space<vmem>>, %arg2: memref<64x8xf32, #tpu.memory_space<vmem>>) attributes {dimension_semantics = [#tpu.dimension_semantics<parallel>], iteration_bounds = array<i64: 1>, scalar_prefetch = 0 : i64, scratch_operands = 0 : i64, tpu.core_type = #tpu.core_type<tc>, window_params = [{transform_indices = @transform_0, window_bounds = array<i64: 64, 32>}, {transform_indices = @transform_1, window_bounds = array<i64: 64, 8>}]} {
    %c0 = arith.constant 0 : index
    %c0_0 = arith.constant 0 : index
    %0 = vector.load %arg1[%c0, %c0_0] : memref<64x32xf32, #tpu.memory_space<vmem>>, vector<64x16xf32>
    %c0_1 = arith.constant 0 : index
    %c16 = arith.constant 16 : index
    %1 = vector.load %arg1[%c0_1, %c16] : memref<64x32xf32, #tpu.memory_space<vmem>>, vector<64x16xf32>
    %2 = arith.maximumf %0, %1 : vector<64x16xf32>
    %3 = tpu.iota {dimensions = array<i32: 0>} : vector<16x8xi32>
    %4 = tpu.iota {dimensions = array<i32: 1>} : vector<16x8xi32>
    %c2_i32 = arith.constant 2 : i32
    %5 = vector.broadcast %c2_i32 : i32 to vector<16x8xi32>
    %6 = arith.muli %5, %4 : vector<16x8xi32>
    %c0_i32 = arith.constant 0 : i32
    %7 = vector.broadcast %c0_i32 : i32 to vector<16x8xi32>
    %8 = arith.addi %6, %7 : vector<16x8xi32>
    %9 = arith.cmpi eq, %3, %8 : vector<16x8xi32>
    %10 = arith.extui %9 : vector<16x8xi1> to vector<16x8xi32>
    %11 = arith.sitofp %10 : vector<16x8xi32> to vector<16x8xf32>
    %cst = arith.constant dense<0.000000e+00> : vector<64x8xf32>
    %12 = tpu.matmul %2, %11, %cst {dimension_numbers = #tpu.dot_dimension_numbers<[1], [0], [0], [1], [0, 0, 1, 1], [], []>} : vector<64x16xf32>, vector<16x8xf32>, vector<64x8xf32> -> vector<64x8xf32>
    %c2_i32_2 = arith.constant 2 : i32
    %13 = vector.broadcast %c2_i32_2 : i32 to vector<16x8xi32>
    %14 = arith.muli %13, %4 : vector<16x8xi32>
    %c1_i32 = arith.constant 1 : i32
    %15 = vector.broadcast %c1_i32 : i32 to vector<16x8xi32>
    %16 = arith.addi %14, %15 : vector<16x8xi32>
    %17 = arith.cmpi eq, %3, %16 : vector<16x8xi32>
    %18 = arith.extui %17 : vector<16x8xi1> to vector<16x8xi32>
    %19 = arith.sitofp %18 : vector<16x8xi32> to vector<16x8xf32>
    %cst_3 = arith.constant dense<0.000000e+00> : vector<64x8xf32>
    %20 = tpu.matmul %2, %19, %cst_3 {dimension_numbers = #tpu.dot_dimension_numbers<[1], [0], [0], [1], [0, 0, 1, 1], [], []>} : vector<64x16xf32>, vector<16x8xf32>, vector<64x8xf32> -> vector<64x8xf32>
    %21 = arith.maximumf %12, %20 : vector<64x8xf32>
    %c0_4 = arith.constant 0 : index
    %c0_5 = arith.constant 0 : index
    %22 = vector.load %arg2[%c0_4, %c0_5] : memref<64x8xf32, #tpu.memory_space<vmem>>, vector<64x8xf32>
    tpu.vector_store %arg2[%c0_4, %c0_5], %21 {strides = array<i32>} : memref<64x8xf32, #tpu.memory_space<vmem>>, vector<64x8xf32>,
    return
  }
  func.func @transform_0(%arg0: i32) -> (i32, i32) {
    %c0_i32 = arith.constant 0 : i32
    %c0_i32_0 = arith.constant 0 : i32
    return %arg0, %c0_i32 : i32, i32
  }
  func.func @transform_1(%arg0: i32) -> (i32, i32) {
    %c0_i32 = arith.constant 0 : i32
    %c0_i32_0 = arith.constant 0 : i32
    return %arg0, %c0_i32 : i32, i32
  }
}

</mosaic_0001>

<llo_original>
// kernel: tpu_custom_call.1
$region0: #{tpu_custom_call.1}
  #allocation0 [shape = 'u32[]', space=smem, size = 0x4, offset = 0x4, fixed_abs, tag = 'smem constant byte address 0x4 - core index']
  #allocation1 [shape = 'u32[144,128]{1,0:T(1,128)}', space=vmem, size = 0x12000, scoped, tag = 'internal scratch']
  %s0 = inlined_call_operand.vmem [shape: f32[64,32], index: 0, kind: input, shape index: {}]
  %s1 = inlined_call_operand.vmem [shape: f32[64,8], index: 1, kind: output, shape index: {}]
  %s2 = sld [smem:[#allocation0]]
  $region14: #{tpu_custom_call.1} parent=0
    _
  %s4 = ssub.s32 1, %s2
  %s5 = scalar_select 0, %s4, %s2
  // Predicated region
  $region2: #{tpu_custom_call.1} parent=0 // pred_check
    _
  $region3: #{tpu_custom_call.1} parent=0 // pred_check_branch
    %7 = sbr.rel (0) target = $region5
  $region4: #{tpu_custom_call.1} parent=0 // pred_region
    _
  $region5: #{tpu_custom_call.1} parent=0 // pred_fallthru
    _
  %v8 = vld [vmem:[%s0] sm:$0xff]
  %v9 = vld [vmem:[%s0 + $0x8] sm:$0xff]
  %v10 = vld [vmem:[%s0 + $0x10] sm:$0xff]
  %v11 = vld [vmem:[%s0 + $0x18] sm:$0xff]
  %v12 = vld [vmem:[%s0 + $0x20] sm:$0xff]
  %v13 = vld [vmem:[%s0 + $0x28] sm:$0xff]
  %v14 = vld [vmem:[%s0 + $0x30] sm:$0xff]
  %v15 = vld [vmem:[%s0 + $0x38] sm:$0xff]
  %24 = vrot.lane.b32.xlu0 %v8, 112
  %v25 = vpop.permute.xlu0 %24
  %26 = vrot.lane.b32.xlu0 %v9, 112
  %v27 = vpop.permute.xlu0 %26
  %28 = vrot.lane.b32.xlu0 %v10, 112
  %v29 = vpop.permute.xlu0 %28
  %30 = vrot.lane.b32.xlu0 %v11, 112
  %v31 = vpop.permute.xlu0 %30
  %32 = vrot.lane.b32.xlu0 %v12, 112
  %v33 = vpop.permute.xlu0 %32
  %34 = vrot.lane.b32.xlu0 %v13, 112
  %v35 = vpop.permute.xlu0 %34
  %36 = vrot.lane.b32.xlu0 %v14, 112
  %v37 = vpop.permute.xlu0 %36
  %38 = vrot.lane.b32.xlu0 %v15, 112
  %v39 = vpop.permute.xlu0 %38
  %v48 = vmax.f32 %v8, %v25
  %v49 = vmax.f32 %v9, %v27
  %v50 = vmax.f32 %v10, %v29
  %v51 = vmax.f32 %v11, %v31
  %v52 = vmax.f32 %v12, %v33
  %v53 = vmax.f32 %v13, %v35
  %v54 = vmax.f32 %v14, %v37
  %v55 = vmax.f32 %v15, %v39
  %v56 = vlaneseq
  %v57 = vshrl.u32 %v56, 7
  %v58 = vadd.s32 %v57, 8
  %v59 = vlaneseq
  %v60 = vand.u32 %v59, 127
  %v61 = vmul.u32 %v60, 2
  %vm62 = vcmp.eq.s32.totalorder %v57, %v61
  %vm63 = vcmp.eq.s32.totalorder %v58, %v61
  %v64 = vsel %vm62, 1, 0
  %v65 = vsel %vm63, 1, 0
  %v66 = vcvt.s32.f32 %v64
  %v67 = vcvt.s32.f32 %v65
  %vm68 = vcmask 130048
  %v70 = vsel %vm68, %v48, 0
  %v73 = vsel %vm68, %v49, 0
  %v76 = vsel %vm68, %v50, 0
  %v79 = vsel %vm68, %v51, 0
  %v82 = vsel %vm68, %v52, 0
  %v85 = vsel %vm68, %v53, 0
  %v88 = vsel %vm68, %v54, 0
  %v91 = vsel %vm68, %v55, 0
  %93 = vmatprep.subr.mxu0 0.0
  %94 = vmatpush1.msra.mxu0 %v66
  %95 = vmatprep.subr.mxu0 0.0
  %96 = vmatpush1.msra.mxu0 %v67
  %97 = vmatprep.subr.mxu0 0.0
  %98 = vmatpush1.msra.mxu0 0.0
  %99 = vmatprep.subr.mxu0 0.0
  %100 = vmatpush1.msra.mxu0 0.0
  %101 = vmatprep.subr.mxu0 0.0
  %102 = vmatpush1.msra.mxu0 0.0
  %103 = vmatprep.subr.mxu0 0.0
  %104 = vmatpush1.msra.mxu0 0.0
  %105 = vmatprep.subr.mxu0 0.0
  %106 = vmatpush1.msra.mxu0 0.0
  %107 = vmatprep.subr.mxu0 0.0
  %108 = vmatpush1.msra.mxu0 0.0
  %109 = vmatprep.subr.mxu0 0.0
  %110 = vmatpush1.msra.mxu0 0.0
  %111 = vmatprep.subr.mxu0 0.0
  %112 = vmatpush1.msra.mxu0 0.0
  %113 = vmatprep.subr.mxu0 0.0
  %114 = vmatpush1.msra.mxu0 0.0
  %115 = vmatprep.subr.mxu0 0.0
  %116 = vmatpush1.msra.mxu0 0.0
  %117 = vmatprep.subr.mxu0 0.0
  %118 = vmatpush1.msra.mxu0 0.0
  %119 = vmatprep.subr.mxu0 0.0
  %120 = vmatpush1.msra.mxu0 0.0
  %121 = vmatprep.subr.mxu0 0.0
  %122 = vmatpush1.msra.mxu0 0.0
  %123 = vmatprep.subr.mxu0 0.0
  %124 = vmatpush1.msra.mxu0 0.0
  %125 = vmatprep.subr.mxu0 0.0
  %126 = vmatpush1.msra.mxu0 0.0
  %127 = vmatprep.subr.mxu0 0.0
  %128 = vmatpush1.msra.mxu0 0.0
  %129 = vmatprep.subr.mxu0 0.0
  %130 = vmatpush1.msra.mxu0 0.0
  %131 = vmatprep.subr.mxu0 0.0
  %132 = vmatpush1.msra.mxu0 0.0
  %133 = vmatprep.subr.mxu0 0.0
  %134 = vmatpush1.msra.mxu0 0.0
  %135 = vmatprep.subr.mxu0 0.0
  %136 = vmatpush1.msra.mxu0 0.0
  %137 = vmatprep.subr.mxu0 0.0
  %138 = vmatpush1.msra.mxu0 0.0
  %139 = vmatprep.subr.mxu0 0.0
  %140 = vmatpush1.msra.mxu0 0.0
  %141 = vmatprep.subr.mxu0 0.0
  %142 = vmatpush1.msra.mxu0 0.0
  %143 = vmatprep.subr.mxu0 0.0
  %144 = vmatpush1.msra.mxu0 0.0
  %145 = vmatprep.subr.mxu0 0.0
  %146 = vmatpush1.msra.mxu0 0.0
  %147 = vmatprep.subr.mxu0 0.0
  %148 = vmatpush1.msra.mxu0 0.0
  %149 = vmatprep.subr.mxu0 0.0
  %150 = vmatpush1.msra.mxu0 0.0
  %151 = vmatprep.subr.mxu0 0.0
  %152 = vmatpush1.msra.mxu0 0.0
  %153 = vmatprep.subr.mxu0 0.0
  %154 = vmatpush1.msra.mxu0 0.0
  %155 = vmatprep.subr.mxu0 0.0
  %156 = vmatpush1.msra.mxu0 0.0
  %157 = vmatprep.mubr.f32.mxu0 0.0
  %158 = vmatmul.mubr.f32.gmra.mrb[0].mxu0 %v70
  %v159 = vpop.f32.mrb[0].mxu0
  %v160 = vadd.f32 0.0, %v159
  %v161 = vpop.f32.mrb[0].mxu0
  %162 = vmatprep.mubr.f32.mxu0 0.0
  %163 = vmatmul.mubr.f32.gmra.mrb[0].mxu0 %v73
  %v164 = vpop.f32.mrb[0].mxu0
  %v165 = vadd.f32 0.0, %v164
  %v166 = vpop.f32.mrb[0].mxu0
  %167 = vmatprep.mubr.f32.mxu0 0.0
  %168 = vmatmul.mubr.f32.gmra.mrb[0].mxu0 %v76
  %v169 = vpop.f32.mrb[0].mxu0
  %v170 = vadd.f32 0.0, %v169
  %v171 = vpop.f32.mrb[0].mxu0
  %172 = vmatprep.mubr.f32.mxu0 0.0
  %173 = vmatmul.mubr.f32.gmra.mrb[0].mxu0 %v79
  %v174 = vpop.f32.mrb[0].mxu0
  %v175 = vadd.f32 0.0, %v174
  %v176 = vpop.f32.mrb[0].mxu0
  %177 = vmatprep.mubr.f32.mxu0 0.0
  %178 = vmatmul.mubr.f32.gmra.mrb[0].mxu0 %v82
  %v179 = vpop.f32.mrb[0].mxu0
  %v180 = vadd.f32 0.0, %v179
  %v181 = vpop.f32.mrb[0].mxu0
  %182 = vmatprep.mubr.f32.mxu0 0.0
  %183 = vmatmul.mubr.f32.gmra.mrb[0].mxu0 %v85
  %v184 = vpop.f32.mrb[0].mxu0
  %v185 = vadd.f32 0.0, %v184
  %v186 = vpop.f32.mrb[0].mxu0
  %187 = vmatprep.mubr.f32.mxu0 0.0
  %188 = vmatmul.mubr.f32.gmra.mrb[0].mxu0 %v88
  %v189 = vpop.f32.mrb[0].mxu0
  %v190 = vadd.f32 0.0, %v189
  %v191 = vpop.f32.mrb[0].mxu0
  %192 = vmatprep.mubr.f32.mxu0 0.0
  %193 = vmatmul.mubr.f32.gmra.mrb[0].mxu0 %v91
  %v194 = vpop.f32.mrb[0].mxu0
  %v195 = vadd.f32 0.0, %v194
  %v196 = vpop.f32.mrb[0].mxu0
  %197 = vdwg.mxu0
  %v198 = vadd.s32 %v61, 1
  %vm199 = vcmp.eq.s32.totalorder %v57, %v198
  %vm200 = vcmp.eq.s32.totalorder %v58, %v198
  %v201 = vsel %vm199, 1, 0
  %v202 = vsel %vm200, 1, 0
  %v203 = vcvt.s32.f32 %v201
  %v204 = vcvt.s32.f32 %v202
  %205 = vmatprep.subr.mxu0 0.0
  %206 = vmatpush1.msra.mxu0 %v203
  %207 = vmatprep.subr.mxu0 0.0
  %208 = vmatpush1.msra.mxu0 %v204
  %209 = vmatprep.subr.mxu0 0.0
  %210 = vmatpush1.msra.mxu0 0.0
  %211 = vmatprep.subr.mxu0 0.0
  %212 = vmatpush1.msra.mxu0 0.0
  %213 = vmatprep.subr.mxu0 0.0
  %214 = vmatpush1.msra.mxu0 0.0
  %215 = vmatprep.subr.mxu0 0.0
  %216 = vmatpush1.msra.mxu0 0.0
  %217 = vmatprep.subr.mxu0 0.0
  %218 = vmatpush1.msra.mxu0 0.0
  %219 = vmatprep.subr.mxu0 0.0
  %220 = vmatpush1.msra.mxu0 0.0
  %221 = vmatprep.subr.mxu0 0.0
  %222 = vmatpush1.msra.mxu0 0.0
  %223 = vmatprep.subr.mxu0 0.0
  %224 = vmatpush1.msra.mxu0 0.0
  %225 = vmatprep.subr.mxu0 0.0
  %226 = vmatpush1.msra.mxu0 0.0
  %227 = vmatprep.subr.mxu0 0.0
  %228 = vmatpush1.msra.mxu0 0.0
  %229 = vmatprep.subr.mxu0 0.0
  %230 = vmatpush1.msra.mxu0 0.0
  %231 = vmatprep.subr.mxu0 0.0
  %232 = vmatpush1.msra.mxu0 0.0
  %233 = vmatprep.subr.mxu0 0.0
  %234 = vmatpush1.msra.mxu0 0.0
  %235 = vmatprep.subr.mxu0 0.0
  %236 = vmatpush1.msra.mxu0 0.0
  %237 = vmatprep.subr.mxu0 0.0
  %238 = vmatpush1.msra.mxu0 0.0
  %239 = vmatprep.subr.mxu0 0.0
  %240 = vmatpush1.msra.mxu0 0.0
  %241 = vmatprep.subr.mxu0 0.0
  %242 = vmatpush1.msra.mxu0 0.0
  %243 = vmatprep.subr.mxu0 0.0
  %244 = vmatpush1.msra.mxu0 0.0
  %245 = vmatprep.subr.mxu0 0.0
  %246 = vmatpush1.msra.mxu0 0.0
  %247 = vmatprep.subr.mxu0 0.0
  %248 = vmatpush1.msra.mxu0 0.0
  %249 = vmatprep.subr.mxu0 0.0
  %250 = vmatpush1.msra.mxu0 0.0
  %251 = vmatprep.subr.mxu0 0.0
  %252 = vmatpush1.msra.mxu0 0.0
  %253 = vmatprep.subr.mxu0 0.0
  %254 = vmatpush1.msra.mxu0 0.0
  %255 = vmatprep.subr.mxu0 0.0
  %256 = vmatpush1.msra.mxu0 0.0
  %257 = vmatprep.subr.mxu0 0.0
  %258 = vmatpush1.msra.mxu0 0.0
  %259 = vmatprep.subr.mxu0 0.0
  %260 = vmatpush1.msra.mxu0 0.0
  %261 = vmatprep.subr.mxu0 0.0
  %262 = vmatpush1.msra.mxu0 0.0
  %263 = vmatprep.subr.mxu0 0.0
  %264 = vmatpush1.msra.mxu0 0.0
  %265 = vmatprep.subr.mxu0 0.0
  %266 = vmatpush1.msra.mxu0 0.0
  %267 = vmatprep.subr.mxu0 0.0
  %268 = vmatpush1.msra.mxu0 0.0
  %269 = vmatprep.mubr.f32.mxu0 0.0
  %270 = vmatmul.mubr.f32.gmra.mrb[0].mxu0 %v70
  %v271 = vpop.f32.mrb[0].mxu0
  %v272 = vadd.f32 0.0, %v271
  %v273 = vpop.f32.mrb[0].mxu0
  %274 = vmatprep.mubr.f32.mxu0 0.0
  %275 = vmatmul.mubr.f32.gmra.mrb[0].mxu0 %v73
  %v276 = vpop.f32.mrb[0].mxu0
  %v277 = vadd.f32 0.0, %v276
  %v278 = vpop.f32.mrb[0].mxu0
  %279 = vmatprep.mubr.f32.mxu0 0.0
  %280 = vmatmul.mubr.f32.gmra.mrb[0].mxu0 %v76
  %v281 = vpop.f32.mrb[0].mxu0
  %v282 = vadd.f32 0.0, %v281
  %v283 = vpop.f32.mrb[0].mxu0
  %284 = vmatprep.mubr.f32.mxu0 0.0
  %285 = vmatmul.mubr.f32.gmra.mrb[0].mxu0 %v79
  %v286 = vpop.f32.mrb[0].mxu0
  %v287 = vadd.f32 0.0, %v286
  %v288 = vpop.f32.mrb[0].mxu0
  %289 = vmatprep.mubr.f32.mxu0 0.0
  %290 = vmatmul.mubr.f32.gmra.mrb[0].mxu0 %v82
  %v291 = vpop.f32.mrb[0].mxu0
  %v292 = vadd.f32 0.0, %v291
  %v293 = vpop.f32.mrb[0].mxu0
  %294 = vmatprep.mubr.f32.mxu0 0.0
  %295 = vmatmul.mubr.f32.gmra.mrb[0].mxu0 %v85
  %v296 = vpop.f32.mrb[0].mxu0
  %v297 = vadd.f32 0.0, %v296
  %v298 = vpop.f32.mrb[0].mxu0
  %299 = vmatprep.mubr.f32.mxu0 0.0
  %300 = vmatmul.mubr.f32.gmra.mrb[0].mxu0 %v88
  %v301 = vpop.f32.mrb[0].mxu0
  %v302 = vadd.f32 0.0, %v301
  %v303 = vpop.f32.mrb[0].mxu0
  %304 = vmatprep.mubr.f32.mxu0 0.0
  %305 = vmatmul.mubr.f32.gmra.mrb[0].mxu0 %v91
  %v306 = vpop.f32.mrb[0].mxu0
  %v307 = vadd.f32 0.0, %v306
  %v308 = vpop.f32.mrb[0].mxu0
  %309 = vdwg.mxu0
  %v310 = vmax.f32 %v160, %v272
  %v311 = vmax.f32 %v165, %v277
  %v312 = vmax.f32 %v170, %v282
  %v313 = vmax.f32 %v175, %v287
  %v314 = vmax.f32 %v180, %v292
  %v315 = vmax.f32 %v185, %v297
  %v316 = vmax.f32 %v190, %v302
  %v317 = vmax.f32 %v195, %v307
  %vm318 = vcmask 64512
  %319 = vst.msk [vmem:[%s1] sm:$0xff] %vm318, %v310
  %320 = vst.msk [vmem:[%s1 + $0x8] sm:$0xff] %vm318, %v311
  %321 = vst.msk [vmem:[%s1 + $0x10] sm:$0xff] %vm318, %v312
  %322 = vst.msk [vmem:[%s1 + $0x18] sm:$0xff] %vm318, %v313
  %323 = vst.msk [vmem:[%s1 + $0x20] sm:$0xff] %vm318, %v314
  %324 = vst.msk [vmem:[%s1 + $0x28] sm:$0xff] %vm318, %v315
  %325 = vst.msk [vmem:[%s1 + $0x30] sm:$0xff] %vm318, %v316
  %326 = vst.msk [vmem:[%s1 + $0x38] sm:$0xff] %vm318, %v317
  // Predicated region
  $region6: #{tpu_custom_call.1} parent=0 // pred_check
    _
  $region7: #{tpu_custom_call.1} parent=0 // pred_check_branch
    %328 = sbr.rel (0) target = $region9
  $region8: #{tpu_custom_call.1} parent=0 // pred_region
    _
  $region9: #{tpu_custom_call.1} parent=0 // pred_fallthru
    _
  // Predicated region
  $region10: #{tpu_custom_call.1} parent=0 // pred_check
    _
  $region11: #{tpu_custom_call.1} parent=0 // pred_check_branch
    %330 = sbr.rel (0) target = $region13
  $region12: #{tpu_custom_call.1} parent=0 // pred_region
    _
  $region13: #{tpu_custom_call.1} parent=0 // pred_fallthru
    _

</llo_original>
